<compile_context>
chip_gen: v7x
topology: tpu7x:2x2x1
jax: 0.10.0
libtpu: 0.0.40
codegen_flags: <defaults>
</compile_context>

<pallas_src>
import functools

import jax
import jax.numpy as jnp
from jax.experimental import pallas as pl
from jax.experimental.pallas import tpu as pltpu

BN_EPS = 1e-5
_VMEM_LIMIT_BYTES = 48 * 1024 * 1024   # leaves headroom even on v7x (64 MiB)
_VMEM_TILE_BUDGET = 24 * 1024 * 1024   # conservative working-set target


def _round_up(x, m):
    return ((x + m - 1) // m) * m


# --------------------------------------------------------------- kernels ---
def _conv_block_kernel(x_ref, w_ref, shift_ref, o_ref, *, neg_slope):
    """Fast path: weights resident, single K tile, no scratch / no phases.

    x_ref     : (pool_area, tm, Kp) bf16   patches, pool partners on axis 0
    w_ref     : (Kp, Np)            bf16   BN-scale-folded conv weights
    shift_ref : (1, Np)             f32    folded conv-bias + BN shift
    o_ref     : (tm, Np)                   pooled + activated output tile
    """
    pa, tm, tk = x_ref.shape
    # one MXU matmul for all pool partners (leading-dim merge is layout-free:
    # trailing (tm, tk) tiles just stack along sublanes)
    acc = jnp.dot(x_ref[...].reshape(pa * tm, tk), w_ref[...],
                  preferred_element_type=jnp.float32)
    m = acc[:tm]
    for i in range(1, pa):                       # fused 2x2 max-pool
        m = jnp.maximum(m, acc[i * tm:(i + 1) * tm])
    z = m + shift_ref[...]                       # conv bias + BN (folded)
    o_ref[...] = jnp.where(z >= 0.0, z, z * neg_slope).astype(o_ref.dtype)


def _conv_block_kernel_ktiled(x_ref, w_ref, shift_ref, o_ref, acc_ref, *,
                              neg_slope):
    """Fallback for very large Cin*kh*kw: K grid axis + VMEM accumulator."""
    pa, tm, tk = x_ref.shape
    k = pl.program_id(1)

    @pl.when(k == 0)
    def _init():
        acc_ref[...] = jnp.zeros_like(acc_ref)

    acc_ref[...] += jnp.dot(x_ref[...].reshape(pa * tm, tk), w_ref[...],
                            preferred_element_type=jnp.float32)

    @pl.when(k == pl.num_programs(1) - 1)
    def _finalize():
        acc = acc_ref[...]
        m = acc[:tm]
        for i in range(1, pa):
            m = jnp.maximum(m, acc[i * tm:(i + 1) * tm])
        z = m + shift_ref[...]
        o_ref[...] = jnp.where(z >= 0.0, z, z * neg_slope).astype(o_ref.dtype)


# ------------------------------------------------------------ tile picker --
def _pick_tiles(G, Kp128, Np, pool_area, budget=_VMEM_TILE_BUDGET):
    """Choose (tm, tk).  tn is always Np (weights resident across N).

    Prefer a single K tile (tk = Kp): no scratch, no phases, the patch LHS
    streams from HBM exactly once.  tm = largest candidate whose
    double-buffered footprint fits the v7x-safe budget; capped at 512 so big
    problems keep >=2 parallel M blocks for v7x's two TensorCores.
    """
    g8 = _round_up(max(G, 1), 8)
    rhs_bytes = 2 * Kp128 * Np * 2
    for tm in (512, 384, 256, 128, 64, 32, 16, 8):
        if tm > g8:
            continue
        fp = 2 * pool_area * tm * Kp128 * 2 + rhs_bytes + 2 * tm * Np * 4
        if fp <= budget:
            return tm, Kp128
    # Very large contraction: tile K and accumulate in VMEM scratch.
    tm = max(8, (min(256, g8) // 8) * 8)
    for tk in (2048, 1024, 512, 256, 128):
        fp = (2 * pool_area * tm * tk * 2 + 2 * tk * Np * 2
              + 2 * tm * Np * 4 + pool_area * tm * Np * 4)
        if fp <= budget:
            return tm, tk
    return 8, 128


# -------------------------------------------------------------- wrapper ----
def conv_block_forward(x_nchw, params, *, kernel_size=(5, 5), stride=(2, 2),
                       padding=(2, 2), pooling_size=(2, 2), act='LReLU',
                       out_dtype=jnp.float32):
    """ConvBlock.forward for NCHW float32 input (PyTorch layout), inference."""
    w, b, gamma, beta, mean, var = params
    kh, kw = kernel_size
    sh, sw = stride
    ph, pw = padding
    qh, qw = pooling_size
    pool_area = qh * qw
    neg_slope = 0.01 if act == 'LReLU' else 0.0      # nn.LeakyReLU default
    cout = w.shape[0]

    # NCHW -> NHWC (channels on lanes)
    x = jnp.transpose(x_nchw, (0, 2, 3, 1)).astype(jnp.float32)
    B, H, W, C = x.shape
    xp = jnp.pad(x, ((0, 0), (ph, ph), (pw, pw), (0, 0)))
    Ho = (H + 2 * ph - kh) // sh + 1
    Wo = (W + 2 * pw - kw) // sw + 1
    K = C * kh * kw

    # ---- im2col patch extraction (plain-JAX glue; see TODO at top) --------
    cols = []
    for di in range(kh):
        for dj in range(kw):
            cols.append(xp[:, di:di + (Ho - 1) * sh + 1:sh,
                           dj:dj + (Wo - 1) * sw + 1:sw, :])      # (B,Ho,Wo,C)
    stacked = jnp.stack(cols, axis=3).reshape(B, Ho, Wo, kh, kw, C)
    # reduction order (C, kh, kw) matches PyTorch weight.reshape(Cout, C*kh*kw)
    patches = jnp.transpose(stacked, (0, 1, 2, 5, 3, 4)).reshape(B, Ho, Wo, K)

    # group pool partners on a leading axis so the 2x2 max-pool fuses into
    # the matmul epilogue (floor mode: remainder rows/cols dropped, matching
    # nn.MaxPool2d ceil_mode=False)
    OHp, OWp = Ho // qh, Wo // qw
    patches = patches[:, :OHp * qh, :OWp * qw]
    patches = patches.reshape(B, OHp, qh, OWp, qw, K)
    patches = jnp.transpose(patches, (2, 4, 0, 1, 3, 5))
    patches = patches.reshape(pool_area, B * OHp * OWp, K)

    # ---- fold BN (eval running stats) into the conv weights ---------------
    scale = gamma / jnp.sqrt(var + BN_EPS)
    w2 = w.reshape(cout, K).T * scale[None, :]       # (K, Cout), scale folded
    shift = (b - mean) * scale + beta                # (Cout,)

    # ---- tile selection: weights-resident, big M tiles ---------------------
    G = B * OHp * OWp
    Np = _round_up(cout, 128)
    tm, tk = _pick_tiles(G, _round_up(K, 128), Np, pool_area)
    Kp = _round_up(K, tk)
    Gp = _round_up(G, tm)
    single_k = (tk == Kp)

    # single pad op (K for MXU-aligned contraction, ragged last M tile)
    lhs = jnp.pad(patches.astype(jnp.bfloat16),
                  ((0, 0), (0, Gp - G), (0, Kp - K)))
    rhs = jnp.pad(w2.astype(jnp.bfloat16), ((0, Kp - K), (0, Np - cout)))
    sft = jnp.pad(shift.astype(jnp.float32), (0, Np - cout)).reshape(1, Np)

    if single_k:
        grid = (Gp // tm,)
        kernel = functools.partial(_conv_block_kernel, neg_slope=neg_slope)
        in_specs = [
            pl.BlockSpec((pool_area, tm, Kp), lambda m: (0, m, 0)),
            pl.BlockSpec((Kp, Np), lambda m: (0, 0)),       # resident weights
            pl.BlockSpec((1, Np), lambda m: (0, 0)),
        ]
        out_specs = pl.BlockSpec((tm, Np), lambda m: (m, 0))
        scratch = []
        dims = ("parallel",)
    else:
        grid = (Gp // tm, Kp // tk)
        kernel = functools.partial(_conv_block_kernel_ktiled,
                                   neg_slope=neg_slope)
        in_specs = [
            pl.BlockSpec((pool_area, tm, tk), lambda m, k: (0, m, k)),
            pl.BlockSpec((tk, Np), lambda m, k: (k, 0)),
            pl.BlockSpec((1, Np), lambda m, k: (0, 0)),
        ]
        out_specs = pl.BlockSpec((tm, Np), lambda m, k: (m, 0))
        scratch = [pltpu.VMEM((pool_area * tm, Np), jnp.float32)]
        dims = ("parallel", "arbitrary")

    out = pl.pallas_call(
        kernel,
        out_shape=jax.ShapeDtypeStruct((Gp, Np), out_dtype),
        grid_spec=pltpu.PrefetchScalarGridSpec(
            num_scalar_prefetch=0,
            grid=grid,
            in_specs=in_specs,
            out_specs=out_specs,
            scratch_shapes=scratch,
        ),
        compiler_params=pltpu.CompilerParams(
            dimension_semantics=dims,
            vmem_limit_bytes=_VMEM_LIMIT_BYTES,
        ),
    )(lhs, rhs, sft)

    # strip padding, back to NCHW; Dropout = identity (inference)
    y = out[:G, :cout].astype(jnp.float32).reshape(B, OHp, OWp, cout)
    return jnp.transpose(y, (0, 3, 1, 2))


# ----------------------------------------------------- pure-JAX reference --
def reference_forward(x_nchw, params, neg_slope=0.01):
    w, b, gamma, beta, mean, var = params
    y = jax.lax.conv_general_dilated(
        x_nchw, w, window_strides=(2, 2), padding=((2, 2), (2, 2)),
        dimension_numbers=('NCHW', 'OIHW', 'NCHW'),
        precision=jax.lax.Precision.HIGHEST)
    y = y + b[None, :, None, None]
    scale = gamma / jnp.sqrt(var + BN_EPS)
    y = (y - mean[None, :, None, None]) * scale[None, :, None, None] \
        + beta[None, :, None, None]
    y = jax.lax.reduce_window(y, -jnp.inf, jax.lax.max,
                              (1, 1, 2, 2), (1, 1, 2, 2), 'VALID')
    return jnp.where(y >= 0, y, neg_slope * y)


# ------------------------------------------------------------------ main ---
if __name__ == "__main__":
    key = jax.random.PRNGKey(0)
    kx, kw_, kb, kg, kbt, km, kv = jax.random.split(key, 7)

    B, CIN, COUT, H, W = 2, 4, 32, 16, 16
    KH = KW = 5
    fan_in = CIN * KH * KW

    x = jax.random.normal(kx, (B, CIN, H, W), jnp.float32)
    w = jax.random.normal(kw_, (COUT, CIN, KH, KW), jnp.float32) / jnp.sqrt(fan_in)
    b = 0.1 * jax.random.normal(kb, (COUT,), jnp.float32)
    gamma = 1.0 + 0.1 * jax.random.normal(kg, (COUT,), jnp.float32)
    beta = 0.1 * jax.random.normal(kbt, (COUT,), jnp.float32)
    mean = 0.1 * jax.random.normal(km, (COUT,), jnp.float32)
    var = 0.9 + 0.1 * jnp.abs(jax.random.normal(kv, (COUT,), jnp.float32))
    params = (w, b, gamma, beta, mean, var)

    fwd = jax.jit(conv_block_forward)
    out = jax.block_until_ready(fwd(x, params))

    assert out.shape == (B, COUT, 4, 4), out.shape
    assert bool(jnp.all(jnp.isfinite(out)))

    ref = reference_forward(x, params)
    max_err = float(jnp.max(jnp.abs(out - ref)))
    assert max_err < 1e-1, f"max abs error vs reference: {max_err}"

    print("KERNEL_OK")
</pallas_src>

<mosaic_0001>
module attributes {stable_mosaic.version = 11 : i64} {
  func.func @_conv_block_kernel(%arg0: i32, %arg1: memref<4x32x128xbf16, #tpu.memory_space<vmem>>, %arg2: memref<128x128xbf16, #tpu.memory_space<vmem>>, %arg3: memref<1x128xf32, #tpu.memory_space<vmem>>, %arg4: memref<32x128xf32, #tpu.memory_space<vmem>>) attributes {dimension_semantics = [#tpu.dimension_semantics<parallel>], iteration_bounds = array<i64: 1>, scalar_prefetch = 0 : i64, scratch_operands = 0 : i64, tpu.core_type = #tpu.core_type<tc>, window_params = [{transform_indices = @transform_0, window_bounds = array<i64: 4, 32, 128>}, {pipeline_mode = #tpu.pipeline_mode<synchronous>, transform_indices = @transform_1, window_bounds = array<i64: 128, 128>}, {pipeline_mode = #tpu.pipeline_mode<synchronous>, transform_indices = @transform_2, window_bounds = array<i64: 1, 128>}, {transform_indices = @transform_3, window_bounds = array<i64: 32, 128>}]} {
    %c0 = arith.constant 0 : index
    %c0_0 = arith.constant 0 : index
    %c0_1 = arith.constant 0 : index
    %0 = vector.load %arg1[%c0, %c0_0, %c0_1] : memref<4x32x128xbf16, #tpu.memory_space<vmem>>, vector<4x32x128xbf16>
    %1 = vector.shape_cast %0 : vector<4x32x128xbf16> to vector<128x128xbf16>
    %c0_2 = arith.constant 0 : index
    %c0_3 = arith.constant 0 : index
    %2 = vector.load %arg2[%c0_2, %c0_3] : memref<128x128xbf16, #tpu.memory_space<vmem>>, vector<128x128xbf16>
    %cst = arith.constant dense<0.000000e+00> : vector<128x128xf32>
    %3 = tpu.matmul %1, %2, %cst {dimension_numbers = #tpu.dot_dimension_numbers<[1], [0], [0], [1], [0, 0, 1, 1], [], []>} : vector<128x128xbf16>, vector<128x128xbf16>, vector<128x128xf32> -> vector<128x128xf32>
    %4 = vector.extract_strided_slice %3 {offsets = [0, 0], sizes = [32, 128], strides = [1, 1]} : vector<128x128xf32> to vector<32x128xf32>
    %5 = vector.extract_strided_slice %3 {offsets = [32, 0], sizes = [32, 128], strides = [1, 1]} : vector<128x128xf32> to vector<32x128xf32>
    %6 = arith.maximumf %4, %5 : vector<32x128xf32>
    %7 = vector.extract_strided_slice %3 {offsets = [64, 0], sizes = [32, 128], strides = [1, 1]} : vector<128x128xf32> to vector<32x128xf32>
    %8 = arith.maximumf %6, %7 : vector<32x128xf32>
    %9 = vector.extract_strided_slice %3 {offsets = [96, 0], sizes = [32, 128], strides = [1, 1]} : vector<128x128xf32> to vector<32x128xf32>
    %10 = arith.maximumf %8, %9 : vector<32x128xf32>
    %c0_4 = arith.constant 0 : index
    %c0_5 = arith.constant 0 : index
    %11 = vector.load %arg3[%c0_4, %c0_5] : memref<1x128xf32, #tpu.memory_space<vmem>>, vector<1x128xf32>
    %12 = vector.broadcast %11 : vector<1x128xf32> to vector<32x128xf32>
    %13 = arith.addf %10, %12 : vector<32x128xf32>
    %cst_6 = arith.constant 0.000000e+00 : f32
    %14 = vector.broadcast %cst_6 : f32 to vector<32x128xf32>
    %15 = arith.cmpf oge, %13, %14 : vector<32x128xf32>
    %cst_7 = arith.constant 0.00999999977 : f32
    %16 = vector.broadcast %cst_7 : f32 to vector<32x128xf32>
    %17 = arith.mulf %13, %16 : vector<32x128xf32>
    %18 = arith.select %15, %13, %17 : vector<32x128xi1>, vector<32x128xf32>
    %c0_8 = arith.constant 0 : index
    %c0_9 = arith.constant 0 : index
    %19 = vector.load %arg4[%c0_8, %c0_9] : memref<32x128xf32, #tpu.memory_space<vmem>>, vector<32x128xf32>
    tpu.vector_store %arg4[%c0_8, %c0_9], %18 {strides = array<i32>} : memref<32x128xf32, #tpu.memory_space<vmem>>, vector<32x128xf32>,
    return
  }
  func.func @transform_0(%arg0: i32) -> (i32, i32, i32) {
    %c0_i32 = arith.constant 0 : i32
    %c0_i32_0 = arith.constant 0 : i32
    %c0_i32_1 = arith.constant 0 : i32
    return %c0_i32, %arg0, %c0_i32_0 : i32, i32, i32
  }
  func.func @transform_1(%arg0: i32) -> (i32, i32) {
    %c0_i32 = arith.constant 0 : i32
    %c0_i32_0 = arith.constant 0 : i32
    %c0_i32_1 = arith.constant 0 : i32
    return %c0_i32, %c0_i32_0 : i32, i32
  }
  func.func @transform_2(%arg0: i32) -> (i32, i32) {
    %c0_i32 = arith.constant 0 : i32
    %c0_i32_0 = arith.constant 0 : i32
    %c0_i32_1 = arith.constant 0 : i32
    return %c0_i32, %c0_i32_0 : i32, i32
  }
  func.func @transform_3(%arg0: i32) -> (i32, i32) {
    %c0_i32 = arith.constant 0 : i32
    %c0_i32_0 = arith.constant 0 : i32
    return %arg0, %c0_i32 : i32, i32
  }
}

</mosaic_0001>

<llo_original>
// kernel: conv_block_forward.1
$region0: #{conv_block_forward.1}
  #allocation0 [shape = 'u32[]', space=smem, size = 0x4, offset = 0x4, fixed_abs, tag = 'smem constant byte address 0x4 - core index']
  #allocation1 [shape = 'u32[144,128]{1,0:T(1,128)}', space=vmem, size = 0x12000, scoped, tag = 'internal scratch']
  %s0 = inlined_call_operand.vmem [shape: bf16[4,32,128], index: 0, kind: input, shape index: {}]
  %s1 = inlined_call_operand.vmem [shape: bf16[128,128], index: 1, kind: input, shape index: {}]
  %s2 = inlined_call_operand.vmem [shape: f32[1,128], index: 2, kind: input, shape index: {}]
  %s3 = inlined_call_operand.hbm [shape: f32[32,128], index: 3, kind: output, shape index: {}]
  %s4 = sld [smem:[#allocation0]]
  $region22: #{conv_block_forward.1} parent=0
    _
  %s6 = ssub.s32 1, %s4
  %s7 = scalar_select 0, %s6, %s4
  $region1: #{conv_block_forward.1} parent=0
    #allocation2 [shape = 'u8[16384]{0}', space=vmem, size = 0x4000, scoped, tag = 'output window, operand 0, single buffered']
    #allocation3 [shape = 's32[1]{0}', space=sflag, size = 0x4, scoped, tag = 'scoped memory for conv_block_forward.1']
    %8 = vsyncpa [#allocation3], 0
    // Predicated region
    $region2: #{conv_block_forward.1} parent=1 // pred_check
      _
    $region3: #{conv_block_forward.1} parent=1 // pred_check_branch
      %10 = sbr.rel (0) target = $region5
    $region4: #{conv_block_forward.1} parent=1 // pred_region
      _
    $region5: #{conv_block_forward.1} parent=1 // pred_fallthru
      _
    // Predicated region
    $region6: #{conv_block_forward.1} parent=1 // pred_check
      _
    $region7: #{conv_block_forward.1} parent=1 // pred_check_branch
      %12 = sbr.rel (0) target = $region9
    $region8: #{conv_block_forward.1} parent=1 // pred_region
      _
    $region9: #{conv_block_forward.1} parent=1 // pred_fallthru
      _
    // Predicated region
    $region10: #{conv_block_forward.1} parent=1 // pred_check
      _
    $region11: #{conv_block_forward.1} parent=1 // pred_check_branch
      %14 = sbr.rel (0) target = $region13
    $region12: #{conv_block_forward.1} parent=1 // pred_region
      _
    $region13: #{conv_block_forward.1} parent=1 // pred_fallthru
      _
    %v16 = vld [vmem:[%s0] sm:$0xf]
    %v17 = vld [vmem:[%s0 + $0x4] sm:$0xf]
    %v18 = vld [vmem:[%s0 + $0x8] sm:$0xf]
    %v19 = vld [vmem:[%s0 + $0xc] sm:$0xf]
    %v20 = vld [vmem:[%s0 + $0x10] sm:$0xf]
    %v21 = vld [vmem:[%s0 + $0x14] sm:$0xf]
    %v22 = vld [vmem:[%s0 + $0x18] sm:$0xf]
    %v23 = vld [vmem:[%s0 + $0x1c] sm:$0xf]
    %v24 = vld [vmem:[%s0 + $0x20] sm:$0xf]
    %v25 = vld [vmem:[%s0 + $0x24] sm:$0xf]
    %v26 = vld [vmem:[%s0 + $0x28] sm:$0xf]
    %v27 = vld [vmem:[%s0 + $0x2c] sm:$0xf]
    %v28 = vld [vmem:[%s0 + $0x30] sm:$0xf]
    %v29 = vld [vmem:[%s0 + $0x34] sm:$0xf]
    %v30 = vld [vmem:[%s0 + $0x38] sm:$0xf]
    %v31 = vld [vmem:[%s0 + $0x3c] sm:$0xf]
    %v32 = vld [vmem:[%s1] sm:$0xf]
    %v33 = vld [vmem:[%s1 + $0x4] sm:$0xf]
    %v34 = vld [vmem:[%s1 + $0x8] sm:$0xf]
    %v35 = vld [vmem:[%s1 + $0xc] sm:$0xf]
    %v36 = vld [vmem:[%s1 + $0x10] sm:$0xf]
    %v37 = vld [vmem:[%s1 + $0x14] sm:$0xf]
    %v38 = vld [vmem:[%s1 + $0x18] sm:$0xf]
    %v39 = vld [vmem:[%s1 + $0x1c] sm:$0xf]
    %v40 = vld [vmem:[%s1 + $0x20] sm:$0xf]
    %v41 = vld [vmem:[%s1 + $0x24] sm:$0xf]
    %v42 = vld [vmem:[%s1 + $0x28] sm:$0xf]
    %v43 = vld [vmem:[%s1 + $0x2c] sm:$0xf]
    %v44 = vld [vmem:[%s1 + $0x30] sm:$0xf]
    %v45 = vld [vmem:[%s1 + $0x34] sm:$0xf]
    %v46 = vld [vmem:[%s1 + $0x38] sm:$0xf]
    %v47 = vld [vmem:[%s1 + $0x3c] sm:$0xf]
    %v64 = vunpack.c.l.b16 %v16
    %v65 = vunpack.c.l.b16 %v17
    %v66 = vunpack.c.l.b16 %v18
    %v67 = vunpack.c.l.b16 %v19
    %v68 = vunpack.c.l.b16 %v20
    %v69 = vunpack.c.l.b16 %v21
    %v70 = vunpack.c.l.b16 %v22
    %v71 = vunpack.c.l.b16 %v23
    %v72 = vunpack.c.l.b16 %v24
    %v73 = vunpack.c.l.b16 %v25
    %v74 = vunpack.c.l.b16 %v26
    %v75 = vunpack.c.l.b16 %v27
    %v76 = vunpack.c.l.b16 %v28
    %v77 = vunpack.c.l.b16 %v29
    %v78 = vunpack.c.l.b16 %v30
    %v79 = vunpack.c.l.b16 %v31
    %v80 = vpack.c.b16 %v65, %v64
    %v81 = vpack.c.b16 %v67, %v66
    %v82 = vpack.c.b16 %v69, %v68
    %v83 = vpack.c.b16 %v71, %v70
    %v84 = vpack.c.b16 %v73, %v72
    %v85 = vpack.c.b16 %v75, %v74
    %v86 = vpack.c.b16 %v77, %v76
    %v87 = vpack.c.b16 %v79, %v78
    %v112 = vunpack.c.l.b16 %v32
    %v113 = vunpack.c.l.b16 %v33
    %v114 = vunpack.c.l.b16 %v34
    %v115 = vunpack.c.l.b16 %v35
    %v116 = vunpack.c.l.b16 %v36
    %v117 = vunpack.c.l.b16 %v37
    %v118 = vunpack.c.l.b16 %v38
    %v119 = vunpack.c.l.b16 %v39
    %v120 = vunpack.c.l.b16 %v40
    %v121 = vunpack.c.l.b16 %v41
    %v122 = vunpack.c.l.b16 %v42
    %v123 = vunpack.c.l.b16 %v43
    %v124 = vunpack.c.l.b16 %v44
    %v125 = vunpack.c.l.b16 %v45
    %v126 = vunpack.c.l.b16 %v46
    %v127 = vunpack.c.l.b16 %v47
    %v128 = vpack.c.b16 %v113, %v112
    %v129 = vpack.c.b16 %v115, %v114
    %v130 = vpack.c.b16 %v117, %v116
    %v131 = vpack.c.b16 %v119, %v118
    %v132 = vpack.c.b16 %v121, %v120
    %v133 = vpack.c.b16 %v123, %v122
    %v134 = vpack.c.b16 %v125, %v124
    %v135 = vpack.c.b16 %v127, %v126
    %144 = vmatprep.subr.bf16.mxu0 0
    %145 = vmatpush1.bf16.msra.mxu0 %v128
    %146 = vmatprep.subr.bf16.mxu0 0
    %147 = vmatpush1.bf16.msra.mxu0 %v129
    %148 = vmatprep.subr.bf16.mxu0 0
    %149 = vmatpush1.bf16.msra.mxu0 %v130
    %150 = vmatprep.subr.bf16.mxu0 0
    %151 = vmatpush1.bf16.msra.mxu0 %v131
    %152 = vmatprep.subr.bf16.mxu0 0
    %153 = vmatpush1.bf16.msra.mxu0 %v132
    %154 = vmatprep.subr.bf16.mxu0 0
    %155 = vmatpush1.bf16.msra.mxu0 %v133
    %156 = vmatprep.subr.bf16.mxu0 0
    %157 = vmatpush1.bf16.msra.mxu0 %v134
    %158 = vmatprep.subr.bf16.mxu0 0
    %159 = vmatpush1.bf16.msra.mxu0 %v135
    %160 = vmatprep.subr.bf16.mxu0 0
    %161 = vmatpush1.bf16.msra.mxu0 0
    %162 = vmatprep.subr.bf16.mxu0 0
    %163 = vmatpush1.bf16.msra.mxu0 0
    %164 = vmatprep.subr.bf16.mxu0 0
    %165 = vmatpush1.bf16.msra.mxu0 0
    %166 = vmatprep.subr.bf16.mxu0 0
    %167 = vmatpush1.bf16.msra.mxu0 0
    %168 = vmatprep.subr.bf16.mxu0 0
    %169 = vmatpush1.bf16.msra.mxu0 0
    %170 = vmatprep.subr.bf16.mxu0 0
    %171 = vmatpush1.bf16.msra.mxu0 0
    %172 = vmatprep.subr.bf16.mxu0 0
    %173 = vmatpush1.bf16.msra.mxu0 0
    %174 = vmatprep.subr.bf16.mxu0 0
    %175 = vmatpush1.bf16.msra.mxu0 0
    %176 = vmatprep.mubr.bf16.mxu0 0
    %177 = vmatmul.mubr.bf16.gmra.mrb[0].mxu0 %v80
    %v178 = vpop.f32.mrb[0].mxu0
    %v179 = vadd.f32 0.0, %v178
    %v180 = vpop.f32.mrb[0].mxu0
    %v181 = vpop.f32.mrb[0].mxu0
    %v182 = vadd.f32 0.0, %v181
    %v183 = vpop.f32.mrb[0].mxu0
    %184 = vmatprep.mubr.bf16.mxu0 0
    %185 = vmatmul.mubr.bf16.gmra.mrb[0].mxu0 %v81
    %v186 = vpop.f32.mrb[0].mxu0
    %v187 = vadd.f32 0.0, %v186
    %v188 = vpop.f32.mrb[0].mxu0
    %v189 = vpop.f32.mrb[0].mxu0
    %v190 = vadd.f32 0.0, %v189
    %v191 = vpop.f32.mrb[0].mxu0
    %192 = vmatprep.mubr.bf16.mxu0 0
    %193 = vmatmul.mubr.bf16.gmra.mrb[0].mxu0 %v82
    %v194 = vpop.f32.mrb[0].mxu0
    %v195 = vadd.f32 0.0, %v194
    %v196 = vpop.f32.mrb[0].mxu0
    %v197 = vpop.f32.mrb[0].mxu0
    %v198 = vadd.f32 0.0, %v197
    %v199 = vpop.f32.mrb[0].mxu0
    %200 = vmatprep.mubr.bf16.mxu0 0
    %201 = vmatmul.mubr.bf16.gmra.mrb[0].mxu0 %v83
    %v202 = vpop.f32.mrb[0].mxu0
    %v203 = vadd.f32 0.0, %v202
    %v204 = vpop.f32.mrb[0].mxu0
    %v205 = vpop.f32.mrb[0].mxu0
    %v206 = vadd.f32 0.0, %v205
    %v207 = vpop.f32.mrb[0].mxu0
    %208 = vmatprep.mubr.bf16.mxu0 0
    %209 = vmatmul.mubr.bf16.gmra.mrb[0].mxu0 %v84
    %v210 = vpop.f32.mrb[0].mxu0
    %v211 = vadd.f32 0.0, %v210
    %v212 = vpop.f32.mrb[0].mxu0
    %v213 = vpop.f32.mrb[0].mxu0
    %v214 = vadd.f32 0.0, %v213
    %v215 = vpop.f32.mrb[0].mxu0
    %216 = vmatprep.mubr.bf16.mxu0 0
    %217 = vmatmul.mubr.bf16.gmra.mrb[0].mxu0 %v85
    %v218 = vpop.f32.mrb[0].mxu0
    %v219 = vadd.f32 0.0, %v218
    %v220 = vpop.f32.mrb[0].mxu0
    %v221 = vpop.f32.mrb[0].mxu0
    %v222 = vadd.f32 0.0, %v221
    %v223 = vpop.f32.mrb[0].mxu0
    %224 = vmatprep.mubr.bf16.mxu0 0
    %225 = vmatmul.mubr.bf16.gmra.mrb[0].mxu0 %v86
    %v226 = vpop.f32.mrb[0].mxu0
    %v227 = vadd.f32 0.0, %v226
    %v228 = vpop.f32.mrb[0].mxu0
    %v229 = vpop.f32.mrb[0].mxu0
    %v230 = vadd.f32 0.0, %v229
    %v231 = vpop.f32.mrb[0].mxu0
    %232 = vmatprep.mubr.bf16.mxu0 0
    %233 = vmatmul.mubr.bf16.gmra.mrb[0].mxu0 %v87
    %v234 = vpop.f32.mrb[0].mxu0
    %v235 = vadd.f32 0.0, %v234
    %v236 = vpop.f32.mrb[0].mxu0
    %v237 = vpop.f32.mrb[0].mxu0
    %v238 = vadd.f32 0.0, %v237
    %v239 = vpop.f32.mrb[0].mxu0
    %240 = vdwg.mxu0
    %v241 = vmax.f32 %v179, %v195
    %v242 = vmax.f32 %v182, %v198
    %v243 = vmax.f32 %v187, %v203
    %v244 = vmax.f32 %v190, %v206
    %v245 = vmax.f32 %v241, %v211
    %v246 = vmax.f32 %v242, %v214
    %v247 = vmax.f32 %v243, %v219
    %v248 = vmax.f32 %v244, %v222
    %v249 = vmax.f32 %v245, %v227
    %v250 = vmax.f32 %v246, %v230
    %v251 = vmax.f32 %v247, %v235
    %v252 = vmax.f32 %v248, %v238
    %v253 = vld [vmem:[%s2] sm:$0x1]
    %v255 = vlaneseq
    %v256 = vshrl.u32 %v255, 7
    %v257 = vsub.s32 0, %v256
    %v258 = vrot.slane %v253, %v257
    %v260 = vadd.f32 %v249, %v258
    %v261 = vadd.f32 %v250, %v258
    %v262 = vadd.f32 %v251, %v258
    %v263 = vadd.f32 %v252, %v258
    %vm264 = vcmp.ge.f32.partialorder %v260, 0.0
    %vm265 = vcmp.ge.f32.partialorder %v261, 0.0
    %vm266 = vcmp.ge.f32.partialorder %v262, 0.0
    %vm267 = vcmp.ge.f32.partialorder %v263, 0.0
    %v268 = vmul.f32 %v260, 0.01
    %v269 = vmul.f32 %v261, 0.01
    %v270 = vmul.f32 %v262, 0.01
    %v271 = vmul.f32 %v263, 0.01
    %v272 = vsel %vm264, %v260, %v268
    %v273 = vsel %vm265, %v261, %v269
    %v274 = vsel %vm266, %v262, %v270
    %v275 = vsel %vm267, %v263, %v271
    %276 = vst [vmem:[#allocation2] sm:$0xff] %v272
    %277 = vst [vmem:[#allocation2 + $0x8] sm:$0xff] %v273
    %278 = vst [vmem:[#allocation2 + $0x10] sm:$0xff] %v274
    %279 = vst [vmem:[#allocation2 + $0x18] sm:$0xff] %v275
    // Predicated region
    $region14: #{conv_block_forward.1} parent=1 // pred_check
      _
    $region15: #{conv_block_forward.1} parent=1 // pred_check_branch
      %281 = sbr.rel (0) target = $region17
    $region16: #{conv_block_forward.1} parent=1 // pred_region
      %s283 = ssub.s32 512, 512
      %284 = vsyncadd [#allocation3], %s283
      %s285 = sshll.u32 [#allocation2], 4
      %s286 = int_to_ptr.vmem [resolvable:$true] %s285
      %291 = dma.vmem_to_hbm [thread:$0]  %s286, 512, %s3, [#allocation3], 128, 128, 8
    $region17: #{conv_block_forward.1} parent=1 // pred_fallthru
      _
    // Predicated region
    $region18: #{conv_block_forward.1} parent=1 // pred_check
      _
    $region19: #{conv_block_forward.1} parent=1 // pred_check_branch
      %293 = sbr.rel (0) target = $region21
    $region20: #{conv_block_forward.1} parent=1 // pred_region
      %294 = dma.done [#allocation3], 512
    $region21: #{conv_block_forward.1} parent=1 // pred_fallthru
      _
    %295 = vsyncpa [#allocation3], 1

</llo_original>
